<compile_context>
chip_gen: v5e
topology: v5e:2x2
jax: 0.10.0
libtpu: 0.0.40
codegen_flags: <defaults>
</compile_context>

<pallas_src>
import math
import functools

import numpy as np
import jax
import jax.numpy as jnp
from jax import lax
from jax.experimental import pallas as pl
from jax.experimental.pallas import tpu as pltpu


_MASK_VALUE = -0.7 * float(np.finfo(np.float32).max)   # finite -> no inf/NaN
_VMEM_BUDGET = 32 * 1024 * 1024                         # safe on v5e/v6e/v7x


# ----------------------------- helpers --------------------------------------

def _pick_tile(dim, preferred, align):
    """Largest tile <= preferred that is a multiple of `align` and divides
    `dim`; falls back to the full dimension (always a legal Pallas block)."""
    if dim <= preferred:
        return dim
    t = (preferred // align) * align
    while t >= align:
        if dim % t == 0:
            return t
        t -= align
    return dim


def _check_vmem(estimated_bytes):
    """Guard the full-dimension fallback of _pick_tile (v7x has 64 MiB VMEM)."""
    if estimated_bytes > _VMEM_BUDGET:
        raise ValueError(
            f"tile choice needs ~{estimated_bytes/2**20:.1f} MiB VMEM "
            f"(> {_VMEM_BUDGET/2**20:.0f} MiB budget); pick smaller tiles")


# ----------------------------- GEMM kernel ----------------------------------

def _matmul_bias_kernel(x_ref, w_ref, b_ref, o_ref, acc_ref):
    # grid = (M//tm, N//tn, K//tk); K is the innermost reduction ("arbitrary").
    @pl.when(pl.program_id(2) == 0)
    def _():
        acc_ref[...] = jnp.zeros_like(acc_ref)

    acc_ref[...] += jnp.dot(x_ref[...], w_ref[...],
                            preferred_element_type=jnp.float32)

    @pl.when(pl.program_id(2) == pl.num_programs(2) - 1)
    def _():
        o_ref[...] = (acc_ref[...] + b_ref[...].astype(jnp.float32)
                      ).astype(o_ref.dtype)


def pallas_linear(x, w_t, b, *, out_dtype=None, tm=256, tn=512, tk=1024):
    """x[M,K] @ w_t[K,N] + b[N] with bf16 operands and f32 accumulation."""
    M, K = x.shape
    _, N = w_t.shape
    out_dtype = out_dtype or x.dtype
    tm = _pick_tile(M, tm, 8)
    tn = _pick_tile(N, tn, 128)
    tk = _pick_tile(K, tk, 128)          # prefer the full K -> single-pass GEMM
    _check_vmem(2 * 2 * (tm * tk + tk * tn) + tm * tn * 4
                + 2 * tm * tn * jnp.dtype(out_dtype).itemsize)
    grid = (M // tm, N // tn, K // tk)
    return pl.pallas_call(
        _matmul_bias_kernel,
        out_shape=jax.ShapeDtypeStruct((M, N), out_dtype),
        grid_spec=pltpu.PrefetchScalarGridSpec(
            num_scalar_prefetch=0,
            grid=grid,
            in_specs=[
                pl.BlockSpec((tm, tk), lambda i, j, k: (i, k)),   # activation
                pl.BlockSpec((tk, tn), lambda i, j, k: (k, j)),   # weight
                pl.BlockSpec((1, tn), lambda i, j, k: (0, j)),    # bias
            ],
            out_specs=pl.BlockSpec((tm, tn), lambda i, j, k: (i, j)),
            scratch_shapes=[pltpu.VMEM((tm, tn), jnp.float32)],
        ),
        compiler_params=pltpu.CompilerParams(
            dimension_semantics=("parallel", "parallel", "arbitrary")),
    )(x.astype(jnp.bfloat16), w_t.astype(jnp.bfloat16), b.reshape(1, N))


# ----------------------------- flash SDPA kernel -----------------------------

def _flash_attn_kernel(q_ref, k_ref, v_ref, *rest, causal, has_pad):
    if has_pad:
        pad_ref, o_ref, m_sc, l_sc, acc_sc = rest
    else:
        o_ref, m_sc, l_sc, acc_sc = rest
        pad_ref = None

    tq = q_ref.shape[2]
    tkv = k_ref.shape[2]
    qi = pl.program_id(2)
    ki = pl.program_id(3)

    if causal:
        last_kv = (qi * tq + tq - 1) // tkv          # last needed kv tile
    else:
        last_kv = pl.num_programs(3) - 1

    def compute():
        @pl.when(ki == 0)
        def _():
            m_sc[...] = jnp.full_like(m_sc, -jnp.inf)
            l_sc[...] = jnp.zeros_like(l_sc)
            acc_sc[...] = jnp.zeros_like(acc_sc)

        q = q_ref[0, 0]                              # [tq, hd]  bf16
        k = k_ref[0, 0]                              # [tkv, hd] bf16
        # scores (MXU, f32 accumulation); 1/sqrt(hd) is folded into q weights
        s = lax.dot_general(q, k, (((1,), (1,)), ((), ())),
                            preferred_element_type=jnp.float32)  # [tq, tkv]
        if has_pad:
            s = s + pad_ref[0].astype(jnp.float32)   # [1, tkv] additive row
        if causal:
            row = qi * tq + lax.broadcasted_iota(jnp.int32, (tq, tkv), 0)
            col = ki * tkv + lax.broadcasted_iota(jnp.int32, (tq, tkv), 1)
            s = jnp.where(col <= row, s, _MASK_VALUE)

        # online softmax update (all f32; v5e VPU/EUP have no bf16)
        m_prev = m_sc[...]                                       # [tq, 1]
        m_new = jnp.maximum(m_prev, jnp.max(s, axis=-1, keepdims=True))
        alpha = jnp.exp(m_prev - m_new)
        p = jnp.exp(s - m_new)                                   # [tq, tkv]
        l_sc[...] = alpha * l_sc[...] + jnp.sum(p, axis=-1, keepdims=True)
        acc_sc[...] = alpha * acc_sc[...] + jnp.dot(
            p.astype(v_ref.dtype), v_ref[0, 0],
            preferred_element_type=jnp.float32)
        m_sc[...] = m_new

        @pl.when(ki == last_kv)
        def _():
            # exact division in the (once per q-tile) epilogue
            o_ref[0, 0] = (acc_sc[...] / l_sc[...]).astype(o_ref.dtype)

    if causal:
        # skip kv tiles that are entirely above the diagonal
        pl.when(ki <= last_kv)(compute)
    else:
        compute()


def pallas_bart_sdpa(q, k, v, *, key_padding_mask=None, causal=True,
                     tq=256, tkv=512):
    """Flash-style SDPA.  q,k,v: [B, nh, S, hd] (bf16 in / bf16 out).
    key_padding_mask: optional additive [B, 1, Skv] row (0 keep / -big mask)."""
    B, nh, S, hd = q.shape
    Skv = k.shape[2]
    tq = _pick_tile(S, tq, 8)
    tkv = _pick_tile(Skv, tkv, 128)
    _check_vmem(2 * 2 * tq * hd + 2 * 2 * 2 * tkv * hd
                + tq * hd * 4 + 4 * tq * 4 + 2 * tq * hd * 2)
    grid = (B, nh, S // tq, Skv // tkv)

    if causal:
        # Remap fully-masked kv tiles onto the last needed tile so Pallas
        # elides their DMAs (block index unchanged -> no copy issued).
        def kv_block(qi, ki):
            return jnp.minimum(ki, (qi * tq + tq - 1) // tkv)
    else:
        def kv_block(qi, ki):
            return ki

    in_specs = [
        pl.BlockSpec((1, 1, tq, hd), lambda b, h, qi, ki: (b, h, qi, 0)),
        pl.BlockSpec((1, 1, tkv, hd),
                     lambda b, h, qi, ki: (b, h, kv_block(qi, ki), 0)),
        pl.BlockSpec((1, 1, tkv, hd),
                     lambda b, h, qi, ki: (b, h, kv_block(qi, ki), 0)),
    ]
    args = [q.astype(jnp.bfloat16), k.astype(jnp.bfloat16),
            v.astype(jnp.bfloat16)]
    has_pad = key_padding_mask is not None
    if has_pad:
        in_specs.append(
            pl.BlockSpec((1, 1, tkv),
                         lambda b, h, qi, ki: (b, 0, kv_block(qi, ki))))
        args.append(key_padding_mask.astype(jnp.float32))

    kernel = functools.partial(_flash_attn_kernel, causal=causal,
                               has_pad=has_pad)
    # TODO(synk): for hd < 128 the q/k/v/o blocks are not lane-dense; packing
    #             two heads per grid step ([B, nh/2, S, 2*hd]) would avoid
    #             masked partial stores.
    return pl.pallas_call(
        kernel,
        out_shape=jax.ShapeDtypeStruct((B, nh, S, hd), jnp.bfloat16),
        grid_spec=pltpu.PrefetchScalarGridSpec(
            num_scalar_prefetch=0,
            grid=grid,
            in_specs=in_specs,
            out_specs=pl.BlockSpec((1, 1, tq, hd),
                                   lambda b, h, qi, ki: (b, h, qi, 0)),
            scratch_shapes=[
                pltpu.VMEM((tq, 1), jnp.float32),    # running max m
                pltpu.VMEM((tq, 1), jnp.float32),    # running sum l
                pltpu.VMEM((tq, hd), jnp.float32),   # un-normalized output acc
            ],
        ),
        compiler_params=pltpu.CompilerParams(
            dimension_semantics=("parallel", "parallel", "parallel",
                                 "arbitrary")),
    )(*args)


# -------------------- out-proj with merge-heads fused in ---------------------

def _merge_out_proj_kernel(ctx_ref, w_ref, b_ref, o_ref, acc_ref):
    # grid = (B, S//tm, N//tn, nh); the heads axis is the innermost reduction,
    # which fuses the merge-heads transpose into the GEMM.
    h = pl.program_id(3)

    @pl.when(h == 0)
    def _():
        acc_ref[...] = jnp.zeros_like(acc_ref)

    acc_ref[...] += jnp.dot(ctx_ref[0, 0], w_ref[0],
                            preferred_element_type=jnp.float32)

    @pl.when(h == pl.num_programs(3) - 1)
    def _():
        o_ref[0] = (acc_ref[...] + b_ref[...].astype(jnp.float32)
                    ).astype(o_ref.dtype)


def pallas_merge_out_proj(ctx, w_o3_t, b_o, *, out_dtype, tm=256, tn=512):
    """out[b,s,n] = sum_h ctx[b,h,s,:] @ w_o3_t[h,:,n] + b_o[n]."""
    B, nh, S, hd = ctx.shape
    N = w_o3_t.shape[-1]
    tm = _pick_tile(S, tm, 8)
    tn = _pick_tile(N, tn, 128)
    _check_vmem(2 * 2 * (tm * hd + hd * tn) + tm * tn * 4
                + 2 * tm * tn * jnp.dtype(out_dtype).itemsize)
    grid = (B, S // tm, N // tn, nh)
    return pl.pallas_call(
        _merge_out_proj_kernel,
        out_shape=jax.ShapeDtypeStruct((B, S, N), out_dtype),
        grid_spec=pltpu.PrefetchScalarGridSpec(
            num_scalar_prefetch=0,
            grid=grid,
            in_specs=[
                pl.BlockSpec((1, 1, tm, hd), lambda b, i, j, h: (b, h, i, 0)),
                pl.BlockSpec((1, hd, tn), lambda b, i, j, h: (h, 0, j)),
                pl.BlockSpec((1, tn), lambda b, i, j, h: (0, j)),
            ],
            out_specs=pl.BlockSpec((1, tm, tn), lambda b, i, j, h: (b, i, j)),
            scratch_shapes=[pltpu.VMEM((tm, tn), jnp.float32)],
        ),
        compiler_params=pltpu.CompilerParams(
            dimension_semantics=("parallel", "parallel", "parallel",
                                 "arbitrary")),
    )(ctx.astype(jnp.bfloat16), w_o3_t.astype(jnp.bfloat16), b_o.reshape(1, N))


# ----------------------------- module forward --------------------------------

def prepare_params(w_q, b_q, w_k, b_k, w_v, b_v, w_o, b_o, num_heads):
    """torch.nn.Linear weights are [out, in]; fold the SDPA scale 1/sqrt(hd)
    into the q projection and pre-cast matmul weights to bf16."""
    H = w_q.shape[0]
    hd = H // num_heads
    scale = 1.0 / math.sqrt(hd)
    w_qkv_t = jnp.concatenate([w_q.T * scale, w_k.T, w_v.T], axis=1)  # [H, 3H]
    b_qkv = jnp.concatenate([b_q * scale, b_k, b_v])                  # [3H]
    return {
        "w_qkv_t": w_qkv_t.astype(jnp.bfloat16),
        "b_qkv": b_qkv.astype(jnp.float32),
        "w_o3_t": w_o.T.reshape(num_heads, hd, H).astype(jnp.bfloat16),
        "b_o": b_o.astype(jnp.float32),
    }


def bart_attention_forward(hidden_states, params, num_heads, *,
                           key_padding_mask=None, causal=True):
    """Pallas implementation of optimum's bart_forward (eval, self-attention,
    no KV cache / cross-attention)."""
    B, S, H = hidden_states.shape
    hd = H // num_heads
    x2d = hidden_states.reshape(B * S, H).astype(jnp.bfloat16)

    # fused QKV projection (scale already folded into the q columns)
    qkv = pallas_linear(x2d, params["w_qkv_t"], params["b_qkv"],
                        out_dtype=jnp.bfloat16)                # [B*S, 3H]

    # single fused head split: [B*S, 3H] -> [3, B, nh, S, hd]
    qkv = qkv.reshape(B, S, 3, num_heads, hd).transpose(2, 0, 3, 1, 4)
    q, k, v = qkv[0], qkv[1], qkv[2]

    # flash SDPA: causal mask generated in-kernel, key-padding row streamed
    ctx = pallas_bart_sdpa(q, k, v, key_padding_mask=key_padding_mask,
                           causal=causal)                       # [B, nh, S, hd]

    # out_proj with merge-heads fused in (heads = reduction axis): no transpose
    out = pallas_merge_out_proj(ctx, params["w_o3_t"], params["b_o"],
                                out_dtype=hidden_states.dtype)  # [B, S, H]
    # TODO(synk): cross-attention / past_key_value concatenation and arbitrary
    #             dense [B,1,S,S] additive masks are not implemented (decoder
    #             self-attention with causal + key-padding masks only).
    return out


# ----------------------------- reference -------------------------------------

def reference_forward(hidden_states, params, num_heads, *,
                      key_padding_mask=None, causal=True):
    """Plain-JAX mirror (full softmax, explicit masks, same bf16 operand casts)."""
    B, S, H = hidden_states.shape
    hd = H // num_heads
    x = hidden_states.reshape(B * S, H).astype(jnp.bfloat16)
    qkv = (jnp.dot(x, params["w_qkv_t"], preferred_element_type=jnp.float32)
           + params["b_qkv"]).astype(jnp.bfloat16)
    qkv = qkv.reshape(B, S, 3, num_heads, hd).transpose(2, 0, 3, 1, 4)
    q, k, v = qkv[0], qkv[1], qkv[2]
    s = jnp.einsum("bhqd,bhkd->bhqk", q, k,
                   preferred_element_type=jnp.float32)
    if key_padding_mask is not None:
        s = s + key_padding_mask[:, :, None, :].astype(jnp.float32)
    if causal:
        keep = jnp.arange(S)[:, None] >= jnp.arange(S)[None, :]
        s = jnp.where(keep[None, None], s, _MASK_VALUE)
    p = jax.nn.softmax(s, axis=-1)
    ctx = jnp.einsum("bhqk,bhkd->bhqd", p.astype(jnp.bfloat16), v,
                     preferred_element_type=jnp.float32).astype(jnp.bfloat16)
    out = jnp.einsum("bhqd,hdn->bqn", ctx, params["w_o3_t"],
                     preferred_element_type=jnp.float32) + params["b_o"]
    return out.astype(hidden_states.dtype)


# ----------------------------- main -------------------------------------------

if __name__ == "__main__":
    B, S, H, NH = 2, 8, 32, 4
    HD = H // NH

    key = jax.random.PRNGKey(0)
    ks = jax.random.split(key, 9)

    def init_w(k):  # ~unit-variance projections so tolerances are meaningful
        return jax.random.normal(k, (H, H), jnp.float32) / math.sqrt(H)

    w_q, w_k, w_v, w_o = (init_w(k) for k in ks[:4])
    b_q, b_k, b_v, b_o = (0.1 * jax.random.normal(k, (H,), jnp.float32)
                          for k in ks[4:8])
    hidden_states = jax.random.normal(ks[8], (B, S, H), jnp.float32)

    # additive key-padding row [B, 1, S]: mask the last key of batch 1
    key_pad = jnp.zeros((B, 1, S), jnp.float32)
    key_pad = key_pad.at[1, 0, S - 1].set(_MASK_VALUE)

    params = prepare_params(w_q, b_q, w_k, b_k, w_v, b_v, w_o, b_o, NH)

    out = bart_attention_forward(hidden_states, params, NH,
                                 key_padding_mask=key_pad, causal=True)
    out = jax.block_until_ready(out)

    ref = reference_forward(hidden_states, params, NH,
                            key_padding_mask=key_pad, causal=True)
    np.testing.assert_allclose(np.asarray(out), np.asarray(ref),
                               rtol=1e-2, atol=1e-2)
    print("KERNEL_OK")
</pallas_src>

<mosaic_0001>
module attributes {stable_mosaic.version = 11 : i64} {
  func.func @_matmul_bias_kernel(%arg0: i32, %arg1: i32, %arg2: i32, %arg3: memref<16x32xbf16, #tpu.memory_space<vmem>>, %arg4: memref<32x96xbf16, #tpu.memory_space<vmem>>, %arg5: memref<1x96xf32, #tpu.memory_space<vmem>>, %arg6: memref<16x96xbf16, #tpu.memory_space<vmem>>, %arg7: memref<16x96xf32, #tpu.memory_space<vmem>>) attributes {dimension_semantics = [#tpu.dimension_semantics<parallel>, #tpu.dimension_semantics<parallel>, #tpu.dimension_semantics<arbitrary>], iteration_bounds = array<i64: 1, 1, 1>, scalar_prefetch = 0 : i64, scratch_operands = 1 : i64, tpu.core_type = #tpu.core_type<tc>, window_params = [{transform_indices = @transform_0, window_bounds = array<i64: 16, 32>}, {transform_indices = @transform_1, window_bounds = array<i64: 32, 96>}, {transform_indices = @transform_2, window_bounds = array<i64: 1, 96>}, {transform_indices = @transform_3, window_bounds = array<i64: 16, 96>}]} {
    %c0_i32 = arith.constant 0 : i32
    %0 = arith.cmpi eq, %arg2, %c0_i32 : i32
    %1 = arith.extui %0 : i1 to i32
    %c0_i32_0 = arith.constant 0 : i32
    %2 = arith.cmpi ne, %1, %c0_i32_0 : i32
    scf.if %2 {
      %cst_10 = arith.constant 0.000000e+00 : f32
      %12 = vector.broadcast %cst_10 : f32 to vector<16x96xf32>
      %c0_11 = arith.constant 0 : index
      %c0_12 = arith.constant 0 : index
      %13 = vector.load %arg7[%c0_11, %c0_12] : memref<16x96xf32, #tpu.memory_space<vmem>>, vector<16x96xf32>
      tpu.vector_store %arg7[%c0_11, %c0_12], %12 {strides = array<i32>} : memref<16x96xf32, #tpu.memory_space<vmem>>, vector<16x96xf32>,
    } else {
    }
    %c0 = arith.constant 0 : index
    %c0_1 = arith.constant 0 : index
    %3 = vector.load %arg7[%c0, %c0_1] : memref<16x96xf32, #tpu.memory_space<vmem>>, vector<16x96xf32>
    %c0_2 = arith.constant 0 : index
    %c0_3 = arith.constant 0 : index
    %4 = vector.load %arg3[%c0_2, %c0_3] : memref<16x32xbf16, #tpu.memory_space<vmem>>, vector<16x32xbf16>
    %c0_4 = arith.constant 0 : index
    %c0_5 = arith.constant 0 : index
    %5 = vector.load %arg4[%c0_4, %c0_5] : memref<32x96xbf16, #tpu.memory_space<vmem>>, vector<32x96xbf16>
    %cst = arith.constant dense<0.000000e+00> : vector<16x96xf32>
    %6 = tpu.matmul %4, %5, %cst {dimension_numbers = #tpu.dot_dimension_numbers<[1], [0], [0], [1], [0, 0, 1, 1], [], []>} : vector<16x32xbf16>, vector<32x96xbf16>, vector<16x96xf32> -> vector<16x96xf32>
    %7 = arith.addf %3, %6 : vector<16x96xf32>
    %c0_6 = arith.constant 0 : index
    %c0_7 = arith.constant 0 : index
    %8 = vector.load %arg7[%c0_6, %c0_7] : memref<16x96xf32, #tpu.memory_space<vmem>>, vector<16x96xf32>
    tpu.vector_store %arg7[%c0_6, %c0_7], %7 {strides = array<i32>} : memref<16x96xf32, #tpu.memory_space<vmem>>, vector<16x96xf32>,
    %c0_i32_8 = arith.constant 0 : i32
    %9 = arith.cmpi eq, %arg2, %c0_i32_8 : i32
    %10 = arith.extui %9 : i1 to i32
    %c0_i32_9 = arith.constant 0 : i32
    %11 = arith.cmpi ne, %10, %c0_i32_9 : i32
    scf.if %11 {
      %c0_10 = arith.constant 0 : index
      %c0_11 = arith.constant 0 : index
      %12 = vector.load %arg7[%c0_10, %c0_11] : memref<16x96xf32, #tpu.memory_space<vmem>>, vector<16x96xf32>
      %c0_12 = arith.constant 0 : index
      %c0_13 = arith.constant 0 : index
      %13 = vector.load %arg5[%c0_12, %c0_13] : memref<1x96xf32, #tpu.memory_space<vmem>>, vector<1x96xf32>
      %14 = vector.broadcast %13 : vector<1x96xf32> to vector<16x96xf32>
      %15 = arith.addf %12, %14 : vector<16x96xf32>
      %16 = arith.truncf %15 : vector<16x96xf32> to vector<16x96xbf16>
      %c0_14 = arith.constant 0 : index
      %c0_15 = arith.constant 0 : index
      %17 = vector.load %arg6[%c0_14, %c0_15] : memref<16x96xbf16, #tpu.memory_space<vmem>>, vector<16x96xbf16>
      tpu.vector_store %arg6[%c0_14, %c0_15], %16 {strides = array<i32>} : memref<16x96xbf16, #tpu.memory_space<vmem>>, vector<16x96xbf16>,
    } else {
    }
    return
  }
  func.func @transform_0(%arg0: i32, %arg1: i32, %arg2: i32) -> (i32, i32) {
    %c0_i32 = arith.constant 0 : i32
    return %arg0, %arg2 : i32, i32
  }
  func.func @transform_1(%arg0: i32, %arg1: i32, %arg2: i32) -> (i32, i32) {
    %c0_i32 = arith.constant 0 : i32
    return %arg2, %arg1 : i32, i32
  }
  func.func @transform_2(%arg0: i32, %arg1: i32, %arg2: i32) -> (i32, i32) {
    %c0_i32 = arith.constant 0 : i32
    %c0_i32_0 = arith.constant 0 : i32
    return %c0_i32, %arg1 : i32, i32
  }
  func.func @transform_3(%arg0: i32, %arg1: i32, %arg2: i32) -> (i32, i32) {
    %c0_i32 = arith.constant 0 : i32
    return %arg0, %arg1 : i32, i32
  }
}

</mosaic_0001>

<llo_original>
// kernel: tpu_custom_call.1
$region0: #{tpu_custom_call.1}
  #allocation0 [shape = 'u32[]', space=smem, size = 0x4, offset = 0x4, fixed_abs, tag = 'smem constant byte address 0x4 - core index']
  #allocation1 [shape = 'u32[72,128]{1,0:T(1,128)}', space=vmem, size = 0x9000, scoped, tag = 'internal scratch']
  #allocation2 [shape = 'f32[16,96]{1,0:T(8,128)}', space=vmem, size = 0x2000, scoped, tag = 'scratch operand']
  %s0 = inlined_call_operand.hbm [shape: bf16[16,32], index: 0, kind: input, shape index: {}]
  %s1 = inlined_call_operand.hbm [shape: bf16[32,96], index: 1, kind: input, shape index: {}]
  %s2 = inlined_call_operand.vmem [shape: f32[1,96], index: 2, kind: input, shape index: {}]
  %s3 = inlined_call_operand.hbm [shape: bf16[16,96], index: 3, kind: output, shape index: {}]
  %s4 = sld [smem:[#allocation0]]
  $region38: #{tpu_custom_call.1} parent=0
    _
  %s6 = ssub.s32 1, %s4
  %s7 = scalar_select 0, %s6, %s4
  $region1: #{tpu_custom_call.1} parent=0
    #allocation3 [shape = 'u8[4096]{0}', space=vmem, size = 0x1000, scoped, tag = 'input window, operand 0, single buffered']
    #allocation4 [shape = 's32[1]{0}', space=sflag, size = 0x4, scoped, tag = 'scoped memory for tpu_custom_call.1']
    #allocation5 [shape = 's32[1]{0}', space=sflag, size = 0x4, scoped, tag = 'scoped memory for tpu_custom_call.1']
    #allocation6 [shape = 'u8[8192]{0}', space=vmem, size = 0x2000, scoped, tag = 'input window, operand 1, single buffered']
    #allocation7 [shape = 's32[1]{0}', space=sflag, size = 0x4, scoped, tag = 'scoped memory for tpu_custom_call.1']
    #allocation8 [shape = 'u8[4096]{0}', space=vmem, size = 0x1000, scoped, tag = 'output window, operand 0, single buffered']
    %8 = vsyncpa [#allocation4], 0
    %9 = vsyncpa [#allocation7], 0
    %10 = vsyncpa [#allocation5], 0
    // Predicated region
    $region2: #{tpu_custom_call.1} parent=1 // pred_check
      _
    $region3: #{tpu_custom_call.1} parent=1 // pred_check_branch
      %12 = sbr.rel (0) target = $region5
    $region4: #{tpu_custom_call.1} parent=1 // pred_region
      %14 = vsyncadd [#allocation4], 0
      %s15 = sshll.u32 %s0, 4
      %s16 = int_to_ptr.hbm [resolvable:$true] %s15
      %s17 = sshll.u32 [#allocation3], 4
      %s18 = int_to_ptr.vmem [resolvable:$true] %s17
      %23 = dma.hbm_to_vmem [thread:$0]  %s16, 128, %s18, [#allocation4], 64, 64, 4
    $region5: #{tpu_custom_call.1} parent=1 // pred_fallthru
      _
    // Predicated region
    $region6: #{tpu_custom_call.1} parent=1 // pred_check
      _
    $region7: #{tpu_custom_call.1} parent=1 // pred_check_branch
      %25 = sbr.rel (0) target = $region9
    $region8: #{tpu_custom_call.1} parent=1 // pred_region
      %27 = vsyncadd [#allocation7], 0
      %s28 = sshll.u32 %s1, 4
      %s29 = int_to_ptr.hbm [resolvable:$true] %s28
      %s30 = sshll.u32 [#allocation6], 4
      %s31 = int_to_ptr.vmem [resolvable:$true] %s30
      %36 = dma.hbm_to_vmem [thread:$0]  %s29, 256, %s31, [#allocation7], 64, 64, 4
    $region9: #{tpu_custom_call.1} parent=1 // pred_fallthru
      _
    // Predicated region
    $region10: #{tpu_custom_call.1} parent=1 // pred_check
      _
    $region11: #{tpu_custom_call.1} parent=1 // pred_check_branch
      %38 = sbr.rel (0) target = $region13
    $region12: #{tpu_custom_call.1} parent=1 // pred_region
      _
    $region13: #{tpu_custom_call.1} parent=1 // pred_fallthru
      _
    // Predicated region
    $region14: #{tpu_custom_call.1} parent=1 // pred_check
      _
    $region15: #{tpu_custom_call.1} parent=1 // pred_check_branch
      %40 = sbr.rel (0) target = $region17
    $region16: #{tpu_custom_call.1} parent=1 // pred_region
      %42 = dma.done [#allocation4], 128
    $region17: #{tpu_custom_call.1} parent=1 // pred_fallthru
      _
    // Predicated region
    $region18: #{tpu_custom_call.1} parent=1 // pred_check
      _
    $region19: #{tpu_custom_call.1} parent=1 // pred_check_branch
      %44 = sbr.rel (0) target = $region21
    $region20: #{tpu_custom_call.1} parent=1 // pred_region
      %46 = dma.done [#allocation7], 256
    $region21: #{tpu_custom_call.1} parent=1 // pred_fallthru
      _
    %p48 = scmp.eq.s32.totalorder 0, 0
    // Predicated region
    $region22: #{tpu_custom_call.1} parent=1 // pred_check
      %p49 = pneg %p48
    $region23: #{tpu_custom_call.1} parent=1 // pred_check_branch
      %51 = sbr.rel (%p49) target = $region25
    $region24: #{tpu_custom_call.1} parent=1 // pred_region
      %vm52 = vcmask 785408
      %53 = vst.msk [vmem:[#allocation2] sm:$0xff] %vm52, 0.0
      %54 = vst.msk [vmem:[#allocation2 + $0x8] sm:$0xff] %vm52, 0.0
    $region25: #{tpu_custom_call.1} parent=1 // pred_fallthru
      _
    %v55 = vld [vmem:[#allocation2] sm:$0xff]
    %v56 = vld [vmem:[#allocation2 + $0x8] sm:$0xff]
    %v57 = vld [vmem:[#allocation3] sm:$0xf]
    %v58 = vld [vmem:[#allocation3 + $0x4] sm:$0xf]
    %v59 = vld [vmem:[#allocation6] sm:$0xf]
    %v60 = vld [vmem:[#allocation6 + $0x4] sm:$0xf]
    %v61 = vld [vmem:[#allocation6 + $0x8] sm:$0xf]
    %v62 = vld [vmem:[#allocation6 + $0xc] sm:$0xf]
    %v65 = vunpack.c.l.b16 %v57
    %v66 = vunpack.c.l.b16 %v58
    %v67 = vpack.c.b16 %v66, %v65
    %v72 = vunpack.c.l.b16 %v59
    %v73 = vunpack.c.l.b16 %v60
    %v74 = vunpack.c.l.b16 %v61
    %v75 = vunpack.c.l.b16 %v62
    %v76 = vpack.c.b16 %v73, %v72
    %v77 = vpack.c.b16 %v75, %v74
    %vm80 = vcmask 261120
    %v82 = vsel %vm80, %v67, 0
    %84 = vmatpush.bf16.msra.mxu0 0
    %85 = vmatpush.bf16.msra.mxu0 0
    %86 = vmatpush.bf16.msra.mxu0 0
    %87 = vmatpush.bf16.msra.mxu0 0
    %88 = vmatpush.bf16.msra.mxu0 0
    %89 = vmatpush.bf16.msra.mxu0 0
    %90 = vmatpush.bf16.msra.mxu0 %v77
    %91 = vmatpush.bf16.msra.mxu0 %v76
    %92 = vmatmul.bf16.gmra.mxu0 %v82
    %v93 = vpop.f32.mrf.mxu0
    %v94 = vadd.f32 0.0, %v93
    %v95 = vpop.f32.mrf.mxu0
    %v96 = vadd.f32 0.0, %v95
    %97 = vdwg.mxu0
    %v98 = vadd.f32 %v55, %v94
    %v99 = vadd.f32 %v56, %v96
    %vm100 = vcmask 785408
    %101 = vst.msk [vmem:[#allocation2] sm:$0xff] %vm100, %v98
    %102 = vst.msk [vmem:[#allocation2 + $0x8] sm:$0xff] %vm100, %v99
    // Predicated region
    $region26: #{tpu_custom_call.1} parent=1 // pred_check
      %p103 = pneg %p48
    $region27: #{tpu_custom_call.1} parent=1 // pred_check_branch
      %105 = sbr.rel (%p103) target = $region29
    $region28: #{tpu_custom_call.1} parent=1 // pred_region
      %v106 = vld [vmem:[#allocation2] sm:$0xff]
      %v107 = vld [vmem:[#allocation2 + $0x8] sm:$0xff]
      %v108 = vld [vmem:[%s2] sm:$0x1]
      %v110 = vperm.slane %v108, 0
      %v112 = vadd.f32 %v106, %v110
      %v113 = vadd.f32 %v107, %v110
      %v114 = vpack.c.bf16 %v112, %v112
      %v115 = vpack.c.bf16 %v113, %v113
      %vm116 = vcmask 781312
      %117 = vst.msk [vmem:[#allocation8] sm:$0xf] %vm116, %v114
      %118 = vst.msk [vmem:[#allocation8 + $0x4] sm:$0xf] %vm116, %v115
    $region29: #{tpu_custom_call.1} parent=1 // pred_fallthru
      _
    // Predicated region
    $region30: #{tpu_custom_call.1} parent=1 // pred_check
      _
    $region31: #{tpu_custom_call.1} parent=1 // pred_check_branch
      %120 = sbr.rel (0) target = $region33
    $region32: #{tpu_custom_call.1} parent=1 // pred_region
      %122 = vsyncadd [#allocation5], 0
      %s123 = sshll.u32 [#allocation8], 4
      %s124 = int_to_ptr.vmem [resolvable:$true] %s123
      %s125 = sshll.u32 %s3, 4
      %s126 = int_to_ptr.hbm [resolvable:$true] %s125
      %131 = dma.vmem_to_hbm [thread:$0]  %s124, 128, %s126, [#allocation5], 64, 64, 4
    $region33: #{tpu_custom_call.1} parent=1 // pred_fallthru
      _
    // Predicated region
    $region34: #{tpu_custom_call.1} parent=1 // pred_check
      _
    $region35: #{tpu_custom_call.1} parent=1 // pred_check_branch
      %133 = sbr.rel (0) target = $region37
    $region36: #{tpu_custom_call.1} parent=1 // pred_region
      %135 = dma.done [#allocation5], 128
    $region37: #{tpu_custom_call.1} parent=1 // pred_fallthru
      _
    %136 = vsyncpa [#allocation4], 1
    %137 = vsyncpa [#allocation7], 1
    %138 = vsyncpa [#allocation5], 1

</llo_original>
